<compile_context>
chip_gen: v5e
topology: v5e:2x2
jax: 0.10.0
libtpu: 0.0.40
codegen_flags: <defaults>
</compile_context>

<pallas_src>
import functools

import numpy as np
import jax
import jax.numpy as jnp
from jax.experimental import pallas as pl
from jax.experimental.pallas import tpu as pltpu


def _round_up(v, m):
    return ((v + m - 1) // m) * m


def _cdiv(a, b):
    return (a + b - 1) // b


def _vmem_capacity_bytes():
    """Physical per-core VMEM, with a conservative (v7x-sized) fallback."""
    try:
        info_fn = getattr(pltpu, "get_tpu_info", None)
        if info_fn is not None:
            cap = getattr(info_fn(), "vmem_capacity_bytes", None)
            if cap:
                return int(cap)
    except Exception:
        pass
    return 64 << 20


def _pick_tile_n(n, c, itemsize, vmem_limit):
    """Rows per block: target ~3 MiB input blocks, bounded by a VMEM budget."""
    row_align = 16 if itemsize < 4 else 8       # keep bf16 sublane packing native
    c_pad = _round_up(c, 128)                   # lanes are physically 128-padded
    target = (3 << 20) // max(1, c_pad * itemsize)
    # working set per row: 2x double-buffered input + ~6 f32 full-tile temporaries
    budget = int(vmem_limit * 0.5)
    max_rows = budget // max(1, c_pad * (2 * itemsize + 6 * 4))
    tile = max(row_align, min(target, max_rows, 8192))
    tile = min(tile, _round_up(n, row_align))
    tile = max(row_align, (tile // row_align) * row_align)
    return tile


def _ldt_loss_kernel(x_ref, tgt_ref, side_ref, o_ref, acc_ref, *, n_valid):
    # x_ref:    (tile_n, C)   logits tile (f32 or bf16; cast to f32 here)
    # tgt_ref:  (tile_n, 1)   int32 targets
    # side_ref: (tile_n, 2)   [Delta[target], weight[target]] (pre-gathered)
    # o_ref:    (8, 128)      per-core partials block: lane0 = sum(w*loss), lane1 = sum(w)
    # acc_ref:  (2,) SMEM     running accumulator (persists across inner grid steps)
    p = pl.program_id(0)                 # "parallel" axis (TensorCore split)
    i = pl.program_id(1)                 # "arbitrary" axis over row blocks
    n_inner = pl.num_programs(1)

    @pl.when(i == 0)
    def _():
        acc_ref[0] = 0.0
        acc_ref[1] = 0.0

    x = x_ref[...].astype(jnp.float32)           # (tile_n, C)
    tgt = tgt_ref[...]                           # (tile_n, 1) int32
    side = side_ref[...]                         # (tile_n, 2) f32
    scale = side[:, 0:1]                         # Delta[target]
    w = side[:, 1:2]                             # weight[target] (ones if no weight)

    tile_n, c = x.shape
    z = x * scale                                # scaled logits
    m = jnp.max(z, axis=-1, keepdims=True)       # numeric stability
    ex = jnp.exp(z - m)                          # no lane padding -> no masks needed
    lse = m + jnp.log(jnp.sum(ex, axis=-1, keepdims=True))

    lane = jax.lax.broadcasted_iota(jnp.int32, (tile_n, c), 1)
    z_tgt = jnp.sum(jnp.where(lane == tgt, z, 0.0), axis=-1, keepdims=True)
    per = lse - z_tgt                            # (tile_n, 1) CE per sample

    # Mask rows beyond n (partial final block / re-read blocks on the split axis).
    rb = p * n_inner + i                         # global row-block index (unclamped)
    row = rb * tile_n + jax.lax.broadcasted_iota(jnp.int32, (tile_n, 1), 0)
    row_valid = row < n_valid                    # bool; use select so NaN can't leak

    acc_ref[0] += jnp.sum(jnp.where(row_valid, w * per, 0.0))
    acc_ref[1] += jnp.sum(jnp.where(row_valid, w, 0.0))

    @pl.when(i == n_inner - 1)
    def _():
        ol = jax.lax.broadcasted_iota(jnp.int32, (8, 128), 1)
        o_ref[...] = jnp.where(ol == 0, acc_ref[0],
                               jnp.where(ol == 1, acc_ref[1], 0.0))


def ldt_loss(x, target, delta_list, gamma=0.3, weight=None, reduction=None,
             tile_n=None, n_split=2):
    """Pallas implementation of LDTLoss.forward (logits x may be f32 or bf16)."""
    x = jnp.asarray(x)
    n, c = x.shape
    itemsize = jnp.dtype(x.dtype).itemsize

    # Parameter setup (matches __init__): Delta = C * D**gamma / sum(D**gamma)
    d = jnp.asarray(delta_list, jnp.float32) ** gamma
    d = d.shape[0] * d / jnp.sum(d)

    tgt = jnp.asarray(target).astype(jnp.int32)
    # Tiny wrapper-side gathers from length-C vectors (negligible HBM, removes
    # full-width selects + XLU reductions from the kernel body).
    delta_tgt = jnp.take(d, tgt)                                   # (N,)
    if weight is None:
        w_tgt = jnp.ones((n,), jnp.float32)
    else:
        w_tgt = jnp.take(jnp.asarray(weight, jnp.float32), tgt)    # (N,)
    side = jnp.stack([delta_tgt, w_tgt], axis=1)                   # (N, 2)
    tgt2 = tgt.reshape(n, 1)

    vmem_cap = _vmem_capacity_bytes()
    vmem_limit = min(vmem_cap // 2, 64 << 20)    # ~32 MiB on v7x, 64 MiB on v5e/v6e

    row_align = 16 if itemsize < 4 else 8
    if tile_n is None:
        tile_n = _pick_tile_n(n, c, itemsize, vmem_limit)
    else:
        tile_n = max(row_align,
                     (min(tile_n, _round_up(n, row_align)) // row_align) * row_align)

    n_blocks = _cdiv(n, tile_n)                  # no N padding; last block partial
    n_split = max(1, min(n_split, n_blocks))     # 2-core split (no-op on 1-TC parts)
    inner = _cdiv(n_blocks, n_split)
    grid = (n_split, inner)

    def rb_map(p, i):
        # Clamp so out-of-range iterations of the split re-read a valid block;
        # their rows are masked out in-kernel via row < n.
        return (jnp.minimum(p * inner + i, n_blocks - 1), 0)

    kernel = functools.partial(_ldt_loss_kernel, n_valid=n)

    cost = pl.CostEstimate(
        flops=int(7 * n * c),
        transcendentals=int(n * c + n),
        bytes_accessed=int(n * c * itemsize + n * 12 + n_split * 8 * 128 * 4),
    )

    out = pl.pallas_call(
        kernel,
        out_shape=jax.ShapeDtypeStruct((n_split * 8, 128), jnp.float32),
        grid_spec=pltpu.PrefetchScalarGridSpec(
            num_scalar_prefetch=0,
            grid=grid,
            in_specs=[
                pl.BlockSpec((tile_n, c), rb_map),   # logits tile (full-C, no pad)
                pl.BlockSpec((tile_n, 1), rb_map),   # targets
                pl.BlockSpec((tile_n, 2), rb_map),   # [Delta[t], weight[t]]
            ],
            out_specs=pl.BlockSpec((8, 128), lambda p, i: (p, 0)),
            scratch_shapes=[pltpu.SMEM((2,), jnp.float32)],
        ),
        compiler_params=pltpu.CompilerParams(
            dimension_semantics=("parallel", "arbitrary"),
            vmem_limit_bytes=vmem_limit,
        ),
        cost_estimate=cost,
    )(x, tgt2, side)

    parts = out.reshape(n_split, 8, 128)
    loss_sum = jnp.sum(parts[:, 0, 0])
    w_sum = jnp.sum(parts[:, 0, 1])
    if reduction == "sum":
        return loss_sum
    return loss_sum / w_sum  # default 'mean' (weighted mean when weight given)


def _ldt_loss_ref(x, target, delta_list, gamma=0.3, weight=None, reduction=None):
    """Pure-JAX reference for correctness check."""
    d = jnp.asarray(delta_list, jnp.float32) ** gamma
    d = d.shape[0] * d / jnp.sum(d)
    z = x.astype(jnp.float32) * d[target][:, None]
    logp = jax.nn.log_softmax(z, axis=-1)
    per = -jnp.take_along_axis(logp, target[:, None], axis=-1)[:, 0]
    if weight is None:
        w = jnp.ones_like(per)
    else:
        w = jnp.asarray(weight, jnp.float32)[target]
    if reduction == "sum":
        return jnp.sum(w * per)
    return jnp.sum(w * per) / jnp.sum(w)


if __name__ == "__main__":
    key = jax.random.PRNGKey(0)
    kx, kt = jax.random.split(key)

    N, C = 50, 16                     # small, ragged on purpose (partial blocks)
    x = jax.random.normal(kx, (N, C), dtype=jnp.float32)
    target = jax.random.randint(kt, (N,), 0, C, dtype=jnp.int32)

    # Deterministic "class frequency" list for Delta_list (length C) and class weights.
    delta_list = np.arange(1, C + 1, dtype=np.float32) * 10.0
    weight = np.linspace(0.5, 1.5, C).astype(np.float32)

    # 1) default 'mean', no weight; small tile forces a multi-step 2x2 grid + tail mask.
    out = jax.block_until_ready(ldt_loss(x, target, delta_list, tile_n=16))
    ref = _ldt_loss_ref(x, target, delta_list)
    assert jnp.allclose(out, ref, rtol=1e-5, atol=1e-5), (out, ref)

    # 2) 'sum' reduction with per-class weights (auto tile_n, single partial block).
    out_s = jax.block_until_ready(
        ldt_loss(x, target, delta_list, weight=weight, reduction="sum"))
    ref_s = _ldt_loss_ref(x, target, delta_list, weight=weight, reduction="sum")
    assert jnp.allclose(out_s, ref_s, rtol=1e-5, atol=1e-5), (out_s, ref_s)

    # 3) weighted mean with bf16 logits (cast to f32 inside the kernel, 16-row align).
    xb = x.astype(jnp.bfloat16)
    out_b = jax.block_until_ready(ldt_loss(xb, target, delta_list, weight=weight))
    ref_b = _ldt_loss_ref(xb.astype(jnp.float32), target, delta_list, weight=weight)
    assert jnp.allclose(out_b, ref_b, rtol=1e-4, atol=1e-4), (out_b, ref_b)

    print("KERNEL_OK")
</pallas_src>

<mosaic_0001>
module attributes {stable_mosaic.version = 11 : i64} {
  func.func @_ldt_loss_kernel(%arg0: i32, %arg1: i32, %arg2: memref<16x16xf32, #tpu.memory_space<vmem>>, %arg3: memref<16x1xi32, #tpu.memory_space<vmem>>, %arg4: memref<16x2xf32, #tpu.memory_space<vmem>>, %arg5: memref<8x128xf32, #tpu.memory_space<vmem>>, %arg6: memref<2xf32, #tpu.memory_space<smem>>) attributes {dimension_semantics = [#tpu.dimension_semantics<parallel>, #tpu.dimension_semantics<arbitrary>], iteration_bounds = array<i64: 2, 2>, scalar_prefetch = 0 : i64, scratch_operands = 1 : i64, tpu.core_type = #tpu.core_type<tc>, window_params = [{transform_indices = @transform_0, window_bounds = array<i64: 16, 16>}, {transform_indices = @transform_1, window_bounds = array<i64: 16, 1>}, {transform_indices = @transform_2, window_bounds = array<i64: 16, 2>}, {transform_indices = @transform_3, window_bounds = array<i64: 8, 128>}]} {
    %c0_i32 = arith.constant 0 : i32
    %0 = arith.cmpi eq, %arg1, %c0_i32 : i32
    %1 = arith.extui %0 : i1 to i32
    %c0_i32_0 = arith.constant 0 : i32
    %2 = arith.cmpi ne, %1, %c0_i32_0 : i32
    scf.if %2 {
      %cst_17 = arith.constant 0.000000e+00 : f32
      %c0_18 = arith.constant 0 : index
      %57 = memref.load %arg6[%c0_18] : memref<2xf32, #tpu.memory_space<smem>>
      memref.store %cst_17, %arg6[%c0_18] : memref<2xf32, #tpu.memory_space<smem>>
      %cst_19 = arith.constant 0.000000e+00 : f32
      %c1_20 = arith.constant 1 : index
      %58 = memref.load %arg6[%c1_20] : memref<2xf32, #tpu.memory_space<smem>>
      memref.store %cst_19, %arg6[%c1_20] : memref<2xf32, #tpu.memory_space<smem>>
    } else {
    }
    %c0 = arith.constant 0 : index
    %c0_1 = arith.constant 0 : index
    %3 = vector.load %arg2[%c0, %c0_1] : memref<16x16xf32, #tpu.memory_space<vmem>>, vector<16x16xf32>
    %c0_2 = arith.constant 0 : index
    %c0_3 = arith.constant 0 : index
    %4 = vector.load %arg3[%c0_2, %c0_3] : memref<16x1xi32, #tpu.memory_space<vmem>>, vector<16x1xi32>
    %c0_4 = arith.constant 0 : index
    %c0_5 = arith.constant 0 : index
    %5 = vector.load %arg4[%c0_4, %c0_5] : memref<16x2xf32, #tpu.memory_space<vmem>>, vector<16x2xf32>
    %6 = vector.extract_strided_slice %5 {offsets = [0, 0], sizes = [16, 1], strides = [1, 1]} : vector<16x2xf32> to vector<16x1xf32>
    %7 = vector.extract_strided_slice %5 {offsets = [0, 1], sizes = [16, 1], strides = [1, 1]} : vector<16x2xf32> to vector<16x1xf32>
    %8 = vector.broadcast %6 : vector<16x1xf32> to vector<16x16xf32>
    %9 = arith.mulf %3, %8 : vector<16x16xf32>
    %cst = arith.constant dense<0xFF800000> : vector<16xf32>
    %10 = vector.multi_reduction <maximumf>, %9, %cst [1] : vector<16x16xf32> to vector<16xf32>
    %11 = vector.shape_cast %10 : vector<16xf32> to vector<16x1xf32>
    %12 = vector.broadcast %11 : vector<16x1xf32> to vector<16x16xf32>
    %13 = arith.subf %9, %12 : vector<16x16xf32>
    %14 = math.exp %13 : vector<16x16xf32>
    %cst_6 = arith.constant dense<0.000000e+00> : vector<16xf32>
    %15 = vector.multi_reduction <add>, %14, %cst_6 [1] : vector<16x16xf32> to vector<16xf32>
    %16 = vector.shape_cast %15 : vector<16xf32> to vector<16x1xf32>
    %17 = math.log %16 : vector<16x1xf32>
    %18 = arith.addf %11, %17 : vector<16x1xf32>
    %19 = tpu.iota {dimensions = array<i32: 1>} : vector<16x16xi32>
    %20 = vector.broadcast %4 : vector<16x1xi32> to vector<16x16xi32>
    %21 = arith.cmpi eq, %19, %20 : vector<16x16xi32>
    %cst_7 = arith.constant 0.000000e+00 : f32
    %22 = vector.broadcast %cst_7 : f32 to vector<16x16xf32>
    %23 = arith.select %21, %9, %22 : vector<16x16xi1>, vector<16x16xf32>
    %cst_8 = arith.constant dense<0.000000e+00> : vector<16xf32>
    %24 = vector.multi_reduction <add>, %23, %cst_8 [1] : vector<16x16xf32> to vector<16xf32>
    %25 = vector.shape_cast %24 : vector<16xf32> to vector<16x1xf32>
    %26 = arith.subf %18, %25 : vector<16x1xf32>
    %c2_i32 = arith.constant 2 : i32
    %27 = arith.muli %arg0, %c2_i32 : i32
    %28 = arith.addi %27, %arg1 : i32
    %c16_i32 = arith.constant 16 : i32
    %29 = arith.muli %28, %c16_i32 : i32
    %30 = tpu.iota {dimensions = array<i32: 0>} : vector<16x1xi32>
    %31 = vector.broadcast %29 : i32 to vector<16x1xi32>
    %32 = arith.addi %31, %30 : vector<16x1xi32>
    %c50_i32 = arith.constant 50 : i32
    %33 = vector.broadcast %c50_i32 : i32 to vector<16x1xi32>
    %34 = arith.cmpi slt, %32, %33 : vector<16x1xi32>
    %c0_9 = arith.constant 0 : index
    %35 = memref.load %arg6[%c0_9] : memref<2xf32, #tpu.memory_space<smem>>
    %36 = arith.mulf %7, %26 : vector<16x1xf32>
    %cst_10 = arith.constant 0.000000e+00 : f32
    %37 = vector.broadcast %cst_10 : f32 to vector<16x1xf32>
    %38 = arith.select %34, %36, %37 : vector<16x1xi1>, vector<16x1xf32>
    %39 = vector.shape_cast %38 : vector<16x1xf32> to vector<1x16x1xf32>
    %cst_11 = arith.constant dense<0.000000e+00> : vector<1xf32>
    %40 = vector.multi_reduction <add>, %39, %cst_11 [1, 2] : vector<1x16x1xf32> to vector<1xf32>
    %41 = vector.shape_cast %40 : vector<1xf32> to vector<1x1x1xf32>
    %42 = vector.extract %41[0, 0, 0] : f32 from vector<1x1x1xf32>
    %43 = arith.addf %35, %42 : f32
    %c0_12 = arith.constant 0 : index
    %44 = memref.load %arg6[%c0_12] : memref<2xf32, #tpu.memory_space<smem>>
    memref.store %43, %arg6[%c0_12] : memref<2xf32, #tpu.memory_space<smem>>
    %c1 = arith.constant 1 : index
    %45 = memref.load %arg6[%c1] : memref<2xf32, #tpu.memory_space<smem>>
    %cst_13 = arith.constant 0.000000e+00 : f32
    %46 = vector.broadcast %cst_13 : f32 to vector<16x1xf32>
    %47 = arith.select %34, %7, %46 : vector<16x1xi1>, vector<16x1xf32>
    %48 = vector.shape_cast %47 : vector<16x1xf32> to vector<1x16x1xf32>
    %cst_14 = arith.constant dense<0.000000e+00> : vector<1xf32>
    %49 = vector.multi_reduction <add>, %48, %cst_14 [1, 2] : vector<1x16x1xf32> to vector<1xf32>
    %50 = vector.shape_cast %49 : vector<1xf32> to vector<1x1x1xf32>
    %51 = vector.extract %50[0, 0, 0] : f32 from vector<1x1x1xf32>
    %52 = arith.addf %45, %51 : f32
    %c1_15 = arith.constant 1 : index
    %53 = memref.load %arg6[%c1_15] : memref<2xf32, #tpu.memory_space<smem>>
    memref.store %52, %arg6[%c1_15] : memref<2xf32, #tpu.memory_space<smem>>
    %c1_i32 = arith.constant 1 : i32
    %54 = arith.cmpi eq, %arg1, %c1_i32 : i32
    %55 = arith.extui %54 : i1 to i32
    %c0_i32_16 = arith.constant 0 : i32
    %56 = arith.cmpi ne, %55, %c0_i32_16 : i32
    scf.if %56 {
      %57 = tpu.iota {dimensions = array<i32: 1>} : vector<8x128xi32>
      %c0_i32_17 = arith.constant 0 : i32
      %58 = vector.broadcast %c0_i32_17 : i32 to vector<8x128xi32>
      %59 = arith.cmpi eq, %57, %58 : vector<8x128xi32>
      %c0_18 = arith.constant 0 : index
      %60 = memref.load %arg6[%c0_18] : memref<2xf32, #tpu.memory_space<smem>>
      %c1_i32_19 = arith.constant 1 : i32
      %61 = vector.broadcast %c1_i32_19 : i32 to vector<8x128xi32>
      %62 = arith.cmpi eq, %57, %61 : vector<8x128xi32>
      %c1_20 = arith.constant 1 : index
      %63 = memref.load %arg6[%c1_20] : memref<2xf32, #tpu.memory_space<smem>>
      %cst_21 = arith.constant 0.000000e+00 : f32
      %64 = vector.broadcast %63 : f32 to vector<8x128xf32>
      %65 = vector.broadcast %cst_21 : f32 to vector<8x128xf32>
      %66 = arith.select %62, %64, %65 : vector<8x128xi1>, vector<8x128xf32>
      %67 = vector.broadcast %60 : f32 to vector<8x128xf32>
      %68 = arith.select %59, %67, %66 : vector<8x128xi1>, vector<8x128xf32>
      %c0_22 = arith.constant 0 : index
      %c0_23 = arith.constant 0 : index
      %69 = vector.load %arg5[%c0_22, %c0_23] : memref<8x128xf32, #tpu.memory_space<vmem>>, vector<8x128xf32>
      tpu.vector_store %arg5[%c0_22, %c0_23], %68 {strides = array<i32>} : memref<8x128xf32, #tpu.memory_space<vmem>>, vector<8x128xf32>,
    } else {
    }
    return
  }
  func.func @transform_0(%arg0: i32, %arg1: i32) -> (i32, i32) {
    %c2_i32 = arith.constant 2 : i32
    %0 = arith.muli %arg0, %c2_i32 : i32
    %1 = arith.addi %0, %arg1 : i32
    %c3_i32 = arith.constant 3 : i32
    %2 = arith.minsi %1, %c3_i32 : i32
    %c0_i32 = arith.constant 0 : i32
    %c0_i32_0 = arith.constant 0 : i32
    return %2, %c0_i32 : i32, i32
  }
  func.func @transform_1(%arg0: i32, %arg1: i32) -> (i32, i32) {
    %c2_i32 = arith.constant 2 : i32
    %0 = arith.muli %arg0, %c2_i32 : i32
    %1 = arith.addi %0, %arg1 : i32
    %c3_i32 = arith.constant 3 : i32
    %2 = arith.minsi %1, %c3_i32 : i32
    %c0_i32 = arith.constant 0 : i32
    %c0_i32_0 = arith.constant 0 : i32
    return %2, %c0_i32 : i32, i32
  }
  func.func @transform_2(%arg0: i32, %arg1: i32) -> (i32, i32) {
    %c2_i32 = arith.constant 2 : i32
    %0 = arith.muli %arg0, %c2_i32 : i32
    %1 = arith.addi %0, %arg1 : i32
    %c3_i32 = arith.constant 3 : i32
    %2 = arith.minsi %1, %c3_i32 : i32
    %c0_i32 = arith.constant 0 : i32
    %c0_i32_0 = arith.constant 0 : i32
    return %2, %c0_i32 : i32, i32
  }
  func.func @transform_3(%arg0: i32, %arg1: i32) -> (i32, i32) {
    %c0_i32 = arith.constant 0 : i32
    %c0_i32_0 = arith.constant 0 : i32
    return %arg0, %c0_i32 : i32, i32
  }
}

</mosaic_0001>

<llo_original>
// kernel: tpu_custom_call.1
$region0: #{tpu_custom_call.1}
  #allocation0 [shape = 'u32[]', space=smem, size = 0x4, offset = 0x4, fixed_abs, tag = 'smem constant byte address 0x4 - core index']
  #allocation1 [shape = 'u32[72,128]{1,0:T(1,128)}', space=vmem, size = 0x9000, scoped, tag = 'internal scratch']
  #allocation2 [shape = 'f32[2]{0:T(128)}', space=smem, size = 0x200, scoped, tag = 'scratch operand']
  %s0 = inlined_call_operand.vmem [shape: f32[50,16], index: 0, kind: input, shape index: {}]
  %s1 = inlined_call_operand.vmem [shape: s32[50,1], index: 1, kind: input, shape index: {}]
  %s2 = inlined_call_operand.vmem [shape: f32[50,2], index: 2, kind: input, shape index: {}]
  %s3 = inlined_call_operand.hbm [shape: f32[16,128], index: 3, kind: output, shape index: {}]
  %s4 = sld [smem:[#allocation0]]
  $region53: #{tpu_custom_call.1} parent=0
    _
  %s6 = ssub.s32 1, %s4
  %s7 = scalar_select 0, %s6, %s4
  $region1: #{tpu_custom_call.1} parent=0
    #allocation3 [shape = 'u8[8192]{0}', space=vmem, size = 0x2000, scoped, tag = 'output window, operand 0']
    #allocation4 [shape = 's32[2]{0}', space=sflag, size = 0x8, scoped, tag = 'scoped memory for tpu_custom_call.1']
    %8 = vsyncpa [#allocation4], 0
    %s9 = scalar_lea.sflag [#allocation4], 1
    %10 = vsyncpa %s9, 0
    loop: start=0, step=1, limit=6
    $region2: #{tpu_custom_call.1} parent=1 // loop_pre_header
      _
    $region3: #{tpu_custom_call.1} parent=1 // loop_header
      %s12 = sphi 0, %s16
      %p13 = scmp.ge.s32.totalorder %s12, 6
      %s19 = sphi 0, %s31
      %s20 = sphi 0, %s27
      %s21 = sphi 0, %s19
      %s22 = sphi 0, %s20
      %s23 = sphi 0, %s21
      %s24 = sphi 0, %s22
      %s42 = sphi 0, %s44
      %s45 = sphi 0, %s42
      %s46 = sphi 0, %s45
      %s62 = sphi 0, %s46
      %s76 = sphi 0, %s78
      %s79 = sphi 0, %s76
      %s80 = sphi 0, %s79
      %s96 = sphi 0, %s80
      %s110 = sphi 0, %s112
      %s113 = sphi 0, %s110
      %s114 = sphi 0, %s113
      %s130 = sphi 0, %s114
      %s136 = sphi 0, %s138
      %s139 = sphi 0, %s136
      %s140 = sphi 0, %s139
      %s156 = sphi 0, %s140
    $region4: #{tpu_custom_call.1} parent=1 // loop_header_branch
      %15 = sbr.rel (%p13) target = $region8
    $region5: #{tpu_custom_call.1} parent=1 // loop_body
      %s17 = ssub.s32 %s12, 1
      %s18 = ssub.s32 %s12, 2
      %s25 = sadd.s32 1, %s20
      %p26 = scmp.ge.s32.totalorder %s25, 2
      %s27 = scalar_select %p26, 0, %s25
      %s28 = sadd.s32 1, %s19
      %s29 = scalar_select %p26, %s28, %s19
      %p30 = scmp.ge.s32.totalorder %s29, 2
      %s31 = scalar_select %p30, 0, %s29
      %s32 = smul.u32 %s19, 2
      %s33 = sadd.s32 %s32, %s20
      %p34 = scmp.lt.s32.totalorder %s33, 3
      %s35 = scalar_select %p34, %s33, 3
      %s36 = smul.u32 %s31, 2
      %s37 = sadd.s32 %s36, %s27
      %p38 = scmp.lt.s32.totalorder %s37, 3
      %s39 = scalar_select %p38, %s37, 3
      %s40 = ssub.s32 %s35, %s39
      %p41 = scmp.eq.s32.totalorder %s40, 0
      %s43 = sadd.s32 %s42, 1
      %s44 = scalar_select %p41, %s42, %s43
      %p47 = pneg %p41
      %p48 = scmp.eq.s32.totalorder %s12, 3
      %p49 = por %p47, %p48
      %p50 = scmp.ne.s32.totalorder %s42, %s45
      %p51 = scmp.eq.s32.totalorder %s12, 0
      %p52 = por %p50, %p51
      %p53 = scmp.ne.s32.totalorder %s42, %s45
      %p54 = scmp.eq.s32.totalorder %s17, 3
      %p55 = por %p53, %p54
      %p56 = scmp.ne.s32.totalorder %s45, %s46
      %p57 = scmp.eq.s32.totalorder %s17, 0
      %p58 = por %p56, %p57
      %p59 = scmp.ne.s32.totalorder %s45, %s46
      %p60 = scmp.eq.s32.totalorder %s18, 3
      %p61 = por %p59, %p60
      %p63 = scmp.ne.s32.totalorder %s46, %s62
      %p64 = scmp.eq.s32.totalorder %s18, 0
      %p65 = por %p63, %p64
      %s66 = smul.u32 %s19, 2
      %s67 = sadd.s32 %s66, %s20
      %p68 = scmp.lt.s32.totalorder %s67, 3
      %s69 = scalar_select %p68, %s67, 3
      %s70 = smul.u32 %s31, 2
      %s71 = sadd.s32 %s70, %s27
      %p72 = scmp.lt.s32.totalorder %s71, 3
      %s73 = scalar_select %p72, %s71, 3
      %s74 = ssub.s32 %s69, %s73
      %p75 = scmp.eq.s32.totalorder %s74, 0
      %s77 = sadd.s32 %s76, 1
      %s78 = scalar_select %p75, %s76, %s77
      %p81 = pneg %p75
      %p82 = scmp.eq.s32.totalorder %s12, 3
      %p83 = por %p81, %p82
      %p84 = scmp.ne.s32.totalorder %s76, %s79
      %p85 = scmp.eq.s32.totalorder %s12, 0
      %p86 = por %p84, %p85
      %p87 = scmp.ne.s32.totalorder %s76, %s79
      %p88 = scmp.eq.s32.totalorder %s17, 3
      %p89 = por %p87, %p88
      %p90 = scmp.ne.s32.totalorder %s79, %s80
      %p91 = scmp.eq.s32.totalorder %s17, 0
      %p92 = por %p90, %p91
      %p93 = scmp.ne.s32.totalorder %s79, %s80
      %p94 = scmp.eq.s32.totalorder %s18, 3
      %p95 = por %p93, %p94
      %p97 = scmp.ne.s32.totalorder %s80, %s96
      %p98 = scmp.eq.s32.totalorder %s18, 0
      %p99 = por %p97, %p98
      %s100 = smul.u32 %s19, 2
      %s101 = sadd.s32 %s100, %s20
      %p102 = scmp.lt.s32.totalorder %s101, 3
      %s103 = scalar_select %p102, %s101, 3
      %s104 = smul.u32 %s31, 2
      %s105 = sadd.s32 %s104, %s27
      %p106 = scmp.lt.s32.totalorder %s105, 3
      %s107 = scalar_select %p106, %s105, 3
      %s108 = ssub.s32 %s103, %s107
      %p109 = scmp.eq.s32.totalorder %s108, 0
      %s111 = sadd.s32 %s110, 1
      %s112 = scalar_select %p109, %s110, %s111
      %p115 = pneg %p109
      %p116 = scmp.eq.s32.totalorder %s12, 3
      %p117 = por %p115, %p116
      %p118 = scmp.ne.s32.totalorder %s110, %s113
      %p119 = scmp.eq.s32.totalorder %s12, 0
      %p120 = por %p118, %p119
      %p121 = scmp.ne.s32.totalorder %s110, %s113
      %p122 = scmp.eq.s32.totalorder %s17, 3
      %p123 = por %p121, %p122
      %p124 = scmp.ne.s32.totalorder %s113, %s114
      %p125 = scmp.eq.s32.totalorder %s17, 0
      %p126 = por %p124, %p125
      %p127 = scmp.ne.s32.totalorder %s113, %s114
      %p128 = scmp.eq.s32.totalorder %s18, 3
      %p129 = por %p127, %p128
      %p131 = scmp.ne.s32.totalorder %s114, %s130
      %p132 = scmp.eq.s32.totalorder %s18, 0
      %p133 = por %p131, %p132
      %s134 = ssub.s32 %s19, %s31
      %p135 = scmp.eq.s32.totalorder %s134, 0
      %s137 = sadd.s32 %s136, 1
      %s138 = scalar_select %p135, %s136, %s137
      %p141 = pneg %p135
      %p142 = scmp.eq.s32.totalorder %s12, 3
      %p143 = por %p141, %p142
      %p144 = scmp.ne.s32.totalorder %s136, %s139
      %p145 = scmp.eq.s32.totalorder %s12, 0
      %p146 = por %p144, %p145
      %p147 = scmp.ne.s32.totalorder %s136, %s139
      %p148 = scmp.eq.s32.totalorder %s17, 3
      %p149 = por %p147, %p148
      %p150 = scmp.ne.s32.totalorder %s139, %s140
      %p151 = scmp.eq.s32.totalorder %s17, 0
      %p152 = por %p150, %p151
      %p153 = scmp.ne.s32.totalorder %s139, %s140
      %p154 = scmp.eq.s32.totalorder %s18, 3
      %p155 = por %p153, %p154
      %p157 = scmp.ne.s32.totalorder %s140, %s156
      %p158 = scmp.eq.s32.totalorder %s18, 0
      %p159 = por %p157, %p158
      %p160 = scmp.le.s32.totalorder 1, %s12
      %p161 = scmp.lt.s32.totalorder %s12, 5
      %p162 = pnand %p160, %p161
      %p163 = pneg %p162
      // Predicated region
      $region9: #{tpu_custom_call.1} parent=5 // pred_check
        _
      $region10: #{tpu_custom_call.1} parent=5 // pred_check_branch
        %165 = sbr.rel (%p162) target = $region12
      $region11: #{tpu_custom_call.1} parent=5 // pred_region
        %s166 = ssub.s32 %s12, 1
      $region12: #{tpu_custom_call.1} parent=5 // pred_fallthru
        _
      %p167 = scmp.lt.s32.totalorder %s12, 4
      // Predicated region
      $region13: #{tpu_custom_call.1} parent=5 // pred_check
        %p168 = pneg %p167
      $region14: #{tpu_custom_call.1} parent=5 // pred_check_branch
        %170 = sbr.rel (%p168) target = $region16
      $region15: #{tpu_custom_call.1} parent=5 // pred_region
        // Predicated region
        $region17: #{tpu_custom_call.1} parent=15 // pred_check
          %p171 = pneg %p52
        $region18: #{tpu_custom_call.1} parent=15 // pred_check_branch
          %173 = sbr.rel (%p171) target = $region20
        $region19: #{tpu_custom_call.1} parent=15 // pred_region
          %s174 = smul.u32 %s19, 2
          %s175 = sadd.s32 %s174, %s20
          %p176 = scmp.lt.s32.totalorder %s175, 3
          %s177 = scalar_select %p176, %s175, 3
          %s178 = smul.u32 2, %s177
          %s179 = ssub.s32 7, %s178
          %p180 = scmp.lt.s32.totalorder %s179, 2
          %s181 = scalar_select %p180, %s179, 2
          %s182 = smul.u32 8, %s181
          %p183 = scmp.lt.s32.totalorder %s178, 6
          %s184 = scalar_select %p183, %s178, 6
          %s185 = smul.addr %s184, 8
          %s186 = scalar_lea.vmem %s0, %s185
          %s187 = smul.u32 %s19, 2
          %s188 = sadd.s32 %s187, %s20
          %p189 = scmp.lt.s32.totalorder %s188, 3
          %s190 = scalar_select %p189, %s188, 3
          %s191 = smul.u32 2, %s190
          %s192 = ssub.s32 7, %s191
          %p193 = scmp.lt.s32.totalorder %s192, 2
          %s194 = scalar_select %p193, %s192, 2
          %s195 = smul.u32 8, %s194
        $region20: #{tpu_custom_call.1} parent=15 // pred_fallthru
          _
        // Predicated region
        $region21: #{tpu_custom_call.1} parent=15 // pred_check
          %p196 = pneg %p86
        $region22: #{tpu_custom_call.1} parent=15 // pred_check_branch
          %198 = sbr.rel (%p196) target = $region24
        $region23: #{tpu_custom_call.1} parent=15 // pred_region
          %s199 = smul.u32 %s19, 2
          %s200 = sadd.s32 %s199, %s20
          %p201 = scmp.lt.s32.totalorder %s200, 3
          %s202 = scalar_select %p201, %s200, 3
          %s203 = smul.u32 2, %s202
          %s204 = ssub.s32 7, %s203
          %p205 = scmp.lt.s32.totalorder %s204, 2
          %s206 = scalar_select %p205, %s204, 2
          %s207 = smul.u32 8, %s206
          %p208 = scmp.lt.s32.totalorder %s203, 6
          %s209 = scalar_select %p208, %s203, 6
          %s210 = smul.addr %s209, 8
          %s211 = scalar_lea.vmem %s1, %s210
          %s212 = smul.u32 %s19, 2
          %s213 = sadd.s32 %s212, %s20
          %p214 = scmp.lt.s32.totalorder %s213, 3
          %s215 = scalar_select %p214, %s213, 3
          %s216 = smul.u32 2, %s215
          %s217 = ssub.s32 7, %s216
          %p218 = scmp.lt.s32.totalorder %s217, 2
          %s219 = scalar_select %p218, %s217, 2
          %s220 = smul.u32 8, %s219
        $region24: #{tpu_custom_call.1} parent=15 // pred_fallthru
          _
        // Predicated region
        $region25: #{tpu_custom_call.1} parent=15 // pred_check
          %p221 = pneg %p120
        $region26: #{tpu_custom_call.1} parent=15 // pred_check_branch
          %223 = sbr.rel (%p221) target = $region28
        $region27: #{tpu_custom_call.1} parent=15 // pred_region
          %s224 = smul.u32 %s19, 2
          %s225 = sadd.s32 %s224, %s20
          %p226 = scmp.lt.s32.totalorder %s225, 3
          %s227 = scalar_select %p226, %s225, 3
          %s228 = smul.u32 2, %s227
          %s229 = ssub.s32 7, %s228
          %p230 = scmp.lt.s32.totalorder %s229, 2
          %s231 = scalar_select %p230, %s229, 2
          %s232 = smul.u32 8, %s231
          %p233 = scmp.lt.s32.totalorder %s228, 6
          %s234 = scalar_select %p233, %s228, 6
          %s235 = smul.addr %s234, 8
          %s236 = scalar_lea.vmem %s2, %s235
          %s237 = smul.u32 %s19, 2
          %s238 = sadd.s32 %s237, %s20
          %p239 = scmp.lt.s32.totalorder %s238, 3
          %s240 = scalar_select %p239, %s238, 3
          %s241 = smul.u32 2, %s240
          %s242 = ssub.s32 7, %s241
          %p243 = scmp.lt.s32.totalorder %s242, 2
          %s244 = scalar_select %p243, %s242, 2
          %s245 = smul.u32 8, %s244
        $region28: #{tpu_custom_call.1} parent=15 // pred_fallthru
          _
      $region16: #{tpu_custom_call.1} parent=5 // pred_fallthru
        _
      %p246 = scmp.le.s32.totalorder 1, %s12
      %p247 = scmp.lt.s32.totalorder %s12, 5
      %p248 = pnand %p246, %p247
      %p249 = pneg %p248
      // Predicated region
      $region29: #{tpu_custom_call.1} parent=5 // pred_check
        _
      $region30: #{tpu_custom_call.1} parent=5 // pred_check_branch
        %251 = sbr.rel (%p248) target = $region32
      $region31: #{tpu_custom_call.1} parent=5 // pred_region
        %s252 = ssub.s32 %s12, 1
        %s253 = smul.u32 %s21, 2
        %s254 = sadd.s32 %s253, %s22
        %p255 = scmp.lt.s32.totalorder %s254, 3
        %s256 = scalar_select %p255, %s254, 3
        %s257 = smul.u32 2, %s256
        %s258 = ssub.s32 7, %s257
        %p259 = scmp.lt.s32.totalorder %s258, 2
        %s260 = scalar_select %p259, %s258, 2
        %s261 = smul.u32 8, %s260
        %p262 = scmp.lt.s32.totalorder %s257, 6
        %s263 = scalar_select %p262, %s257, 6
        %s264 = smul.addr %s263, 8
        %s265 = scalar_lea.vmem %s0, %s264
        %p266 = pneg %p58
        %p267 = pneg %p55
        %s268 = smul.u32 %s21, 2
        %s269 = sadd.s32 %s268, %s22
        %p270 = scmp.lt.s32.totalorder %s269, 3
        %s271 = scalar_select %p270, %s269, 3
        %s272 = smul.u32 2, %s271
        %s273 = ssub.s32 7, %s272
        %p274 = scmp.lt.s32.totalorder %s273, 2
        %s275 = scalar_select %p274, %s273, 2
        %s276 = smul.u32 8, %s275
        %p277 = scmp.lt.s32.totalorder %s272, 6
        %s278 = scalar_select %p277, %s272, 6
        %s279 = smul.addr %s278, 8
        %s280 = scalar_lea.vmem %s1, %s279
        %p281 = pneg %p92
        %p282 = pneg %p89
        %s283 = smul.u32 %s21, 2
        %s284 = sadd.s32 %s283, %s22
        %p285 = scmp.lt.s32.totalorder %s284, 3
        %s286 = scalar_select %p285, %s284, 3
        %s287 = smul.u32 2, %s286
        %s288 = ssub.s32 7, %s287
        %p289 = scmp.lt.s32.totalorder %s288, 2
        %s290 = scalar_select %p289, %s288, 2
        %s291 = smul.u32 8, %s290
        %p292 = scmp.lt.s32.totalorder %s287, 6
        %s293 = scalar_select %p292, %s287, 6
        %s294 = smul.addr %s293, 8
        %s295 = scalar_lea.vmem %s2, %s294
        %p296 = pneg %p126
        %p297 = pneg %p123
        %p298 = pneg %p152
        %p299 = pneg %p149
        %s300 = sand.u32 %s139, 1
        %s301 = scalar_lea.sflag [#allocation4], %s300
        %s302 = sand.u32 %s139, 1
        %s303 = smul.addr %s302, 8
        %s304 = scalar_lea.vmem [#allocation3], %s303
        %s305 = smul.u32 %s21, 2
        %s306 = sadd.s32 %s305, %s22
        %p307 = scmp.lt.s32.totalorder %s306, 3
        %s308 = scalar_select %p307, %s306, 3
        %s309 = smul.u32 2, %s308
        %s310 = ssub.s32 7, %s309
        %p311 = scmp.lt.s32.totalorder %s310, 2
        %s312 = scalar_select %p311, %s310, 2
        %s313 = smul.u32 8, %s312
        %p314 = scmp.lt.s32.totalorder %s309, 6
        %s315 = scalar_select %p314, %s309, 6
        %s316 = smul.addr %s315, 8
        %s317 = scalar_lea.vmem %s0, %s316
        %s318 = smul.u32 %s21, 2
        %s319 = sadd.s32 %s318, %s22
        %p320 = scmp.lt.s32.totalorder %s319, 3
        %s321 = scalar_select %p320, %s319, 3
        %s322 = smul.u32 2, %s321
        %s323 = ssub.s32 7, %s322
        %p324 = scmp.lt.s32.totalorder %s323, 2
        %s325 = scalar_select %p324, %s323, 2
        %s326 = smul.u32 8, %s325
        %s327 = smul.u32 %s21, 2
        %s328 = sadd.s32 %s327, %s22
        %p329 = scmp.lt.s32.totalorder %s328, 3
        %s330 = scalar_select %p329, %s328, 3
        %s331 = smul.u32 2, %s330
        %s332 = ssub.s32 7, %s331
        %p333 = scmp.lt.s32.totalorder %s332, 2
        %s334 = scalar_select %p333, %s332, 2
        %s335 = smul.u32 8, %s334
        %p336 = scmp.lt.s32.totalorder %s331, 6
        %s337 = scalar_select %p336, %s331, 6
        %s338 = smul.addr %s337, 8
        %s339 = scalar_lea.vmem %s1, %s338
        %s340 = smul.u32 %s21, 2
        %s341 = sadd.s32 %s340, %s22
        %p342 = scmp.lt.s32.totalorder %s341, 3
        %s343 = scalar_select %p342, %s341, 3
        %s344 = smul.u32 2, %s343
        %s345 = ssub.s32 7, %s344
        %p346 = scmp.lt.s32.totalorder %s345, 2
        %s347 = scalar_select %p346, %s345, 2
        %s348 = smul.u32 8, %s347
        %s349 = smul.u32 %s21, 2
        %s350 = sadd.s32 %s349, %s22
        %p351 = scmp.lt.s32.totalorder %s350, 3
        %s352 = scalar_select %p351, %s350, 3
        %s353 = smul.u32 2, %s352
        %s354 = ssub.s32 7, %s353
        %p355 = scmp.lt.s32.totalorder %s354, 2
        %s356 = scalar_select %p355, %s354, 2
        %s357 = smul.u32 8, %s356
        %p358 = scmp.lt.s32.totalorder %s353, 6
        %s359 = scalar_select %p358, %s353, 6
        %s360 = smul.addr %s359, 8
        %s361 = scalar_lea.vmem %s2, %s360
        %s362 = smul.u32 %s21, 2
        %s363 = sadd.s32 %s362, %s22
        %p364 = scmp.lt.s32.totalorder %s363, 3
        %s365 = scalar_select %p364, %s363, 3
        %s366 = smul.u32 2, %s365
        %s367 = ssub.s32 7, %s366
        %p368 = scmp.lt.s32.totalorder %s367, 2
        %s369 = scalar_select %p368, %s367, 2
        %s370 = smul.u32 8, %s369
        %p371 = scmp.eq.s32.totalorder %s22, 0
        // Predicated region
        $region33: #{tpu_custom_call.1} parent=31 // pred_check
          %p372 = pneg %p371
        $region34: #{tpu_custom_call.1} parent=31 // pred_check_branch
          %374 = sbr.rel (%p372) target = $region36
        $region35: #{tpu_custom_call.1} parent=31 // pred_region
          %s375 = scalar_lea.smem [#allocation2], 0
          %376 = sst [smem:[%s375]] 0.0
          %s377 = scalar_lea.smem [#allocation2], 1
          %378 = sst [smem:[%s377]] 0.0
        $region36: #{tpu_custom_call.1} parent=31 // pred_fallthru
          _
        %v379 = vld [vmem:[%s317] sm:$0xff]
        %v380 = vld [vmem:[%s317 + $0x8] sm:$0xff]
        %v381 = vld [vmem:[%s339] sm:$0xff]
        %v382 = vld [vmem:[%s339 + $0x8] sm:$0xff]
        %v383 = vld [vmem:[%s361] sm:$0xff]
        %v384 = vld [vmem:[%s361 + $0x8] sm:$0xff]
        %386 = vset.pattern.permute.xlu0 0
        %387 = vperm.xlu0 %386, %v383
        %v388 = vpop.permute.xlu0 %387
        %391 = vset.pattern.permute.xlu0 0
        %392 = vperm.xlu0 %391, %v384
        %v393 = vpop.permute.xlu0 %392
        %v395 = vmul.f32 %v379, %v388
        %v396 = vmul.f32 %v380, %v393
        %vm397 = vcmask 130048
        %v398 = vsel %vm397, %v395, -inf
        %399 = vmax.xlane.f32.xlu0 %v398
        %v400 = vpop.xlane.xlu0 %399
        %v401 = vsel %vm397, %v396, -inf
        %402 = vmax.xlane.f32.xlu0 %v401
        %v403 = vpop.xlane.xlu0 %402
        %v404 = vsub.f32 %v395, %v400
        %v405 = vsub.f32 %v396, %v403
        %v406 = vmul.f32 %v404, 1.442695
        %v407 = vpow.pop %v406
        %v408 = vmul.f32 %v405, 1.442695
        %v409 = vpow.pop %v408
        %v410 = vsel %vm397, %v407, 0.0
        %411 = vadd.xlane.f32.xlu0 %v410
        %v412 = vpop.xlane.xlu0 %411
        %v413 = vsel %vm397, %v409, 0.0
        %414 = vadd.xlane.f32.xlu0 %v413
        %v415 = vpop.xlane.xlu0 %414
        %v416 = vlog2.pop %v412
        %v417 = vmul.f32 %v416, 0.6931472
        %v418 = vlog2.pop %v415
        %v419 = vmul.f32 %v418, 0.6931472
        %v420 = vadd.f32 %v400, %v417
        %v421 = vadd.f32 %v403, %v419
        %v422 = vlaneseq
        %v423 = vand.u32 %v422, 127
        %424 = vset.pattern.permute.xlu0 0
        %425 = vperm.xlu0 %424, %v381
        %v426 = vpop.permute.xlu0 %425
        %427 = vset.pattern.permute.xlu0 0
        %428 = vperm.xlu0 %427, %v382
        %v429 = vpop.permute.xlu0 %428
        %vm430 = vcmp.eq.s32.totalorder %v423, %v426
        %vm431 = vcmp.eq.s32.totalorder %v423, %v429
        %v432 = vsel %vm430, %v395, 0.0
        %v433 = vsel %vm431, %v396, 0.0
        %v434 = vsel %vm397, %v432, 0.0
        %435 = vadd.xlane.f32.xlu0 %v434
        %v436 = vpop.xlane.xlu0 %435
        %v437 = vsel %vm397, %v433, 0.0
        %438 = vadd.xlane.f32.xlu0 %v437
        %v439 = vpop.xlane.xlu0 %438
        %v440 = vsub.f32 %v420, %v436
        %v441 = vsub.f32 %v421, %v439
        %s442 = smul.u32 %s21, 2
        %s443 = sadd.s32 %s442, %s22
        %s444 = smul.u32 %s443, 16
        %v445 = vlaneseq
        %v446 = vshrl.u32 %v445, 7
        %v447 = vadd.s32 %v446, 8
        %v448 = vstv %s444
        %v449 = vadd.s32 %v448, %v446
        %v450 = vadd.s32 %v448, %v447
        %vm451 = vcmp.lt.s32.totalorder %v449, 50
        %vm452 = vcmp.lt.s32.totalorder %v450, 50
        %s453 = sld [smem:[#allocation2]]
        %v454 = vmul.f32 %v383, %v440
        %v455 = vmul.f32 %v384, %v441
        %v456 = vsel %vm451, %v454, 0.0
        %v457 = vsel %vm452, %v455, 0.0
        %460 = vrot.lane.b32.xlu0 %v456, 127
        %v461 = vpop.permute.xlu0 %460
        %462 = vrot.lane.b32.xlu0 %v457, 127
        %v463 = vpop.permute.xlu0 %462
        %vm466 = vcmask 7168
        %v467 = vsel %vm466, %v461, 0.0
        %v468 = vsel %vm466, %v463, 0.0
        %v469 = vadd.f32 %v467, %v468
        %470 = vadd.xlane.f32.xlu0 %v469
        %v471 = vpop.xlane.xlu0 %470
        %v472 = vrot.slane %v471, 4
        %v473 = vadd.f32 %v471, %v472
        %v474 = vrot.slane %v473, 2
        %v475 = vadd.f32 %v473, %v474
        %v476 = vrot.slane %v475, 1
        %v477 = vadd.f32 %v475, %v476
        %s478 = vtos %v477
        %s479 = sadd.f32 %s453, %s478
        %s480 = scalar_lea.smem [#allocation2], 0
        %481 = sst [smem:[%s480]] %s479
        %s482 = sld [smem:[#allocation2 + $0x1]]
        %v483 = vsel %vm451, %v383, 0.0
        %v484 = vsel %vm452, %v384, 0.0
        %487 = vrot.lane.b32.xlu0 %v483, 127
        %v488 = vpop.permute.xlu0 %487
        %489 = vrot.lane.b32.xlu0 %v484, 127
        %v490 = vpop.permute.xlu0 %489
        %v493 = vsel %vm466, %v488, 0.0
        %v494 = vsel %vm466, %v490, 0.0
        %v495 = vadd.f32 %v493, %v494
        %496 = vadd.xlane.f32.xlu0 %v495
        %v497 = vpop.xlane.xlu0 %496
        %v498 = vrot.slane %v497, 4
        %v499 = vadd.f32 %v497, %v498
        %v500 = vrot.slane %v499, 2
        %v501 = vadd.f32 %v499, %v500
        %v502 = vrot.slane %v501, 1
        %v503 = vadd.f32 %v501, %v502
        %s504 = vtos %v503
        %s505 = sadd.f32 %s482, %s504
        %s506 = scalar_lea.smem [#allocation2], 1
        %507 = sst [smem:[%s506]] %s505
        %p508 = scmp.eq.s32.totalorder %s22, 1
        // Predicated region
        $region37: #{tpu_custom_call.1} parent=31 // pred_check
          %p509 = pneg %p508
        $region38: #{tpu_custom_call.1} parent=31 // pred_check_branch
          %511 = sbr.rel (%p509) target = $region40
        $region39: #{tpu_custom_call.1} parent=31 // pred_region
          %vm512 = vcmp.eq.s32.totalorder %v423, 0
          %s513 = sld [smem:[#allocation2]]
          %vm514 = vcmp.eq.s32.totalorder %v423, 1
          %s515 = sld [smem:[#allocation2 + $0x1]]
          %v516 = vstv %s515
          %v517 = vsel %vm514, %v516, 0.0
          %v518 = vstv %s513
          %v519 = vsel %vm512, %v518, %v517
          %520 = vst [vmem:[%s304] sm:$0xff] %v519
        $region40: #{tpu_custom_call.1} parent=31 // pred_fallthru
          _
        %s521 = sand.u32 %s139, 1
        %s522 = scalar_lea.sflag [#allocation4], %s521
        %s523 = sand.u32 %s139, 1
        %s524 = smul.addr %s523, 8
        %s525 = scalar_lea.vmem [#allocation3], %s524
        // Predicated region
        $region41: #{tpu_custom_call.1} parent=31 // pred_check
          %p526 = pneg %p149
        $region42: #{tpu_custom_call.1} parent=31 // pred_check_branch
          %528 = sbr.rel (%p526) target = $region44
        $region43: #{tpu_custom_call.1} parent=31 // pred_region
          %530 = vsyncadd %s522, 0
          %s531 = smul.addr %s21, 8
          %s532 = scalar_lea.hbm %s3, %s531
          %s534 = sshll.u32 %s525, 4
          %s535 = int_to_ptr.vmem [resolvable:$true] %s534
          %s536 = sshll.u32 %s532, 4
          %s537 = int_to_ptr.hbm [resolvable:$true] %s536
          %539 = dma.vmem_to_hbm [thread:$0]  %s535, 128, %s537, %s522
        $region44: #{tpu_custom_call.1} parent=31 // pred_fallthru
          _
      $region32: #{tpu_custom_call.1} parent=5 // pred_fallthru
        _
      %p540 = scmp.le.s32.totalorder 2, %s12
      // Predicated region
      $region45: #{tpu_custom_call.1} parent=5 // pred_check
        %p541 = pneg %p540
      $region46: #{tpu_custom_call.1} parent=5 // pred_check_branch
        %543 = sbr.rel (%p541) target = $region48
      $region47: #{tpu_custom_call.1} parent=5 // pred_region
        %s544 = ssub.s32 %s12, 2
        // Predicated region
        $region49: #{tpu_custom_call.1} parent=47 // pred_check
          %p545 = pneg %p155
        $region50: #{tpu_custom_call.1} parent=47 // pred_check_branch
          %547 = sbr.rel (%p545) target = $region52
        $region51: #{tpu_custom_call.1} parent=47 // pred_region
          %s548 = sand.u32 %s140, 1
          %s549 = scalar_lea.sflag [#allocation4], %s548
          %s550 = sand.u32 %s140, 1
          %s551 = smul.addr %s550, 8
          %s552 = scalar_lea.vmem [#allocation3], %s551
          %554 = dma.done %s549, 128
        $region52: #{tpu_custom_call.1} parent=47 // pred_fallthru
          _
      $region48: #{tpu_custom_call.1} parent=5 // pred_fallthru
        _
    $region6: #{tpu_custom_call.1} parent=1 // loop_footer
      %s16 = sadd.s32 1, %s12
    $region7: #{tpu_custom_call.1} parent=1 // loop_footer_branch
      %11 = sbr.rel target = $region3
    $region8: #{tpu_custom_call.1} parent=1 // loop_exit
      _
    %555 = vsyncpa [#allocation4], 1
    %s556 = scalar_lea.sflag [#allocation4], 1
    %557 = vsyncpa %s556, 1

</llo_original>
